<compile_context>
chip_gen: v6e
topology: v6e:2x2x1
jax: 0.10.0
libtpu: 0.0.40
codegen_flags: <defaults>
</compile_context>

<pallas_src>
import functools

import jax
import jax.numpy as jnp
from jax.experimental import pallas as pl
from jax.experimental.pallas import tpu as pltpu


def _decoder_kernel(x_ref, hc0_ref, w_ref, b_ref, wf_ref, bf_ref,
                    y_ref, hcn_ref, *, hidden, seq_len, in_feat):
    """Single-invocation LSTM decoder.

    Refs:
      x_ref  : (T*B, F)     full input sequence, time-major, flattened 2D
      hc0_ref: (2, B, H)    [h0; c0]
      w_ref  : (F+H, 4H)    [W_ih^T; W_hh^T]  (gate order i, f, g, o)
      b_ref  : (1, 4H)      b_ih + b_hh
      wf_ref : (H, O_pad)   final_linear.weight^T, zero-padded to 128 lanes
      bf_ref : (1, O_pad)   final_linear.bias, zero-padded
      y_ref  : (T*B, O_pad) output sequence (lane-dense slab)
      hcn_ref: (2, B, H)    [h_n; c_n]
    """
    H, T, F = hidden, seq_len, in_feat
    B = hc0_ref.shape[1]

    w_all = w_ref[...]                                   # (F+H, 4H) f32
    wih_bf = w_all[:F, :].astype(jnp.bfloat16)           # (F, 4H)
    whh_bf = w_all[F:, :].astype(jnp.bfloat16)           # (H, 4H), resident in vregs

    # ---- Hoisted out of the serial recurrence ------------------------------
    # One batched input projection (T*B, F) @ (F, 4H) in bf16, f32 accumulate,
    # bias broadcast once.
    x_proj = (jnp.dot(x_ref[...].astype(jnp.bfloat16), wih_bf,
                      preferred_element_type=jnp.float32)
              + b_ref[...])                              # (T*B, 4H) f32

    h = hc0_ref[0]                                       # (B, H) f32
    c = hc0_ref[1]                                       # (B, H) f32

    # ---- Serial recurrence: T is static -> fully unrolled ------------------
    # Per step: exactly one (bf16) MXU push h @ W_hh^T, one full-width sigmoid
    # and two tanh EUP pushes, VPU state update.  h/c/gates stay f32.
    hs = []
    for t in range(T):
        gates = x_proj[t * B:(t + 1) * B, :] + jnp.dot(
            h.astype(jnp.bfloat16), whh_bf,
            preferred_element_type=jnp.float32)          # (B, 4H) f32

        sig = jax.nn.sigmoid(gates)                      # one full-vreg sigmoid
        tnh = jnp.tanh(gates)                            # one full-vreg tanh
        i = sig[:, 0 * H:1 * H]
        f = sig[:, 1 * H:2 * H]
        g = tnh[:, 2 * H:3 * H]
        o = sig[:, 3 * H:4 * H]

        c = f * c + i * g
        h = o * jnp.tanh(c)
        hs.append(h)                                     # stays in vregs (8 KiB total)

    hcn_ref[0] = h
    hcn_ref[1] = c

    # ---- Hoisted final_linear: one (T*B, H) @ (H, O_pad) bf16 matmul --------
    hs_all = jnp.concatenate(hs, axis=0)                 # (T*B, H) f32, register-resident
    y = (jnp.dot(hs_all.astype(jnp.bfloat16), wf_ref[...].astype(jnp.bfloat16),
                 preferred_element_type=jnp.float32)
         + bf_ref[...])                                  # (T*B, O_pad) f32
    y_ref[...] = y                                       # single unmasked lane-dense store


@jax.jit
def decoder_net_forward(x, hidden, params):
    """Pallas equivalent of DecoderNet.forward(input, hidden)."""
    h0, c0 = hidden
    T, B, F = x.shape
    H = params["w_hh_t"].shape[0]
    O = params["w_f_t"].shape[1]
    O_pad = max(128, ((O + 127) // 128) * 128)           # lane-dense output width

    # ---- One-time host-side packing (layout plumbing, outside the kernel) ---
    x2d = x.reshape(T * B, F)                                            # (T*B, F)
    hc0 = jnp.concatenate([h0, c0], axis=0)                              # (2, B, H)
    w_cat = jnp.concatenate([params["w_ih_t"], params["w_hh_t"]], 0)     # (F+H, 4H)
    wf_pad = jnp.pad(params["w_f_t"], ((0, 0), (0, O_pad - O)))          # (H, O_pad)
    bf_pad = jnp.pad(params["b_f"], ((0, 0), (0, O_pad - O)))            # (1, O_pad)

    kernel = functools.partial(_decoder_kernel, hidden=H, seq_len=T, in_feat=F)

    vmem = pl.BlockSpec(memory_space=pltpu.MemorySpace.VMEM)   # whole array in VMEM
    y2d, hcn = pl.pallas_call(
        kernel,
        out_shape=(
            jax.ShapeDtypeStruct((T * B, O_pad), jnp.float32),
            jax.ShapeDtypeStruct((2, B, H), jnp.float32),
        ),
        in_specs=[vmem] * 6,
        out_specs=(vmem, vmem),
    )(x2d, hc0, w_cat, params["b"], wf_pad, bf_pad)

    y = y2d[:, :O].reshape(T, B, O)
    return y, (hcn[0:1], hcn[1:2])


def init_params(key, num_output_features, hidden=32):
    """Deterministic params with PyTorch-style uniform(-1/sqrt(H), 1/sqrt(H)) init."""
    F, H = num_output_features, hidden
    bound = 1.0 / jnp.sqrt(jnp.float32(H))
    ks = jax.random.split(key, 6)
    u = lambda k, shape: jax.random.uniform(k, shape, jnp.float32, -bound, bound)
    w_ih = u(ks[0], (4 * H, F))        # PyTorch weight_ih_l0
    w_hh = u(ks[1], (4 * H, H))        # PyTorch weight_hh_l0
    b_ih = u(ks[2], (4 * H,))
    b_hh = u(ks[3], (4 * H,))
    w_f = u(ks[4], (F, H))             # final_linear.weight
    b_f = u(ks[5], (F,))
    return {
        "w_ih_t": w_ih.T,                                  # (F, 4H)
        "w_hh_t": w_hh.T,                                  # (H, 4H)
        "b": (b_ih + b_hh).reshape(1, 4 * H),              # (1, 4H)
        "w_f_t": w_f.T,                                    # (H, F)
        "b_f": b_f.reshape(1, F),                          # (1, F)
    }


def decoder_net_reference(x, hidden, params):
    """Pure-JAX f32 reference of the same computation (for verification)."""
    h0, c0 = hidden
    H = params["w_hh_t"].shape[0]

    def step(carry, x_t):
        h, c = carry
        gates = x_t @ params["w_ih_t"] + h @ params["w_hh_t"] + params["b"]
        i = jax.nn.sigmoid(gates[:, 0 * H:1 * H])
        f = jax.nn.sigmoid(gates[:, 1 * H:2 * H])
        g = jnp.tanh(gates[:, 2 * H:3 * H])
        o = jax.nn.sigmoid(gates[:, 3 * H:4 * H])
        c = f * c + i * g
        h = o * jnp.tanh(c)
        return (h, c), h

    (hn, cn), hs = jax.lax.scan(step, (h0[0], c0[0]), x)
    y = hs @ params["w_f_t"] + params["b_f"]
    return y, (hn[None], cn[None])


if __name__ == "__main__":
    T, B, F, H = 8, 8, 16, 32   # seq=8, batch=8, num_output_features=16, lstm_layer_size=32

    key = jax.random.PRNGKey(0)
    k_x, k_h, k_c, k_p = jax.random.split(key, 4)

    x = jax.random.normal(k_x, (T, B, F), jnp.float32)
    h0 = jax.random.normal(k_h, (1, B, H), jnp.float32)
    c0 = jax.random.normal(k_c, (1, B, H), jnp.float32)
    params = init_params(k_p, num_output_features=F, hidden=H)

    y, (hn, cn) = decoder_net_forward(x, (h0, c0), params)
    jax.block_until_ready((y, hn, cn))

    y_ref, (hn_ref, cn_ref) = decoder_net_reference(x, (h0, c0), params)
    # Tolerance loosened vs. the pure-f32 version because MXU operands are bf16
    # (f32 accumulation); all elementwise/state math remains f32.
    assert jnp.allclose(y, y_ref, atol=3e-2, rtol=1e-2)
    assert jnp.allclose(hn, hn_ref, atol=3e-2, rtol=1e-2)
    assert jnp.allclose(cn, cn_ref, atol=3e-2, rtol=1e-2)

    print("KERNEL_OK")
</pallas_src>

<mosaic_0001>
module attributes {stable_mosaic.version = 11 : i64} {
  func.func @_decoder_kernel(%arg0: memref<64x16xf32, #tpu.memory_space<vmem>>, %arg1: memref<2x8x32xf32, #tpu.memory_space<vmem>>, %arg2: memref<48x128xf32, #tpu.memory_space<vmem>>, %arg3: memref<1x128xf32, #tpu.memory_space<vmem>>, %arg4: memref<32x128xf32, #tpu.memory_space<vmem>>, %arg5: memref<1x128xf32, #tpu.memory_space<vmem>>, %arg6: memref<64x128xf32, #tpu.memory_space<vmem>>, %arg7: memref<2x8x32xf32, #tpu.memory_space<vmem>>) attributes {dimension_semantics = [], scalar_prefetch = 0 : i64, scratch_operands = 0 : i64, tpu.core_type = #tpu.core_type<tc>} {
    %c0 = arith.constant 0 : index
    %c0_0 = arith.constant 0 : index
    %0 = vector.load %arg2[%c0, %c0_0] : memref<48x128xf32, #tpu.memory_space<vmem>>, vector<48x128xf32>
    %1 = vector.extract_strided_slice %0 {offsets = [0, 0], sizes = [16, 128], strides = [1, 1]} : vector<48x128xf32> to vector<16x128xf32>
    %2 = arith.truncf %1 : vector<16x128xf32> to vector<16x128xbf16>
    %3 = vector.extract_strided_slice %0 {offsets = [16, 0], sizes = [32, 128], strides = [1, 1]} : vector<48x128xf32> to vector<32x128xf32>
    %4 = arith.truncf %3 : vector<32x128xf32> to vector<32x128xbf16>
    %c0_1 = arith.constant 0 : index
    %c0_2 = arith.constant 0 : index
    %5 = vector.load %arg0[%c0_1, %c0_2] : memref<64x16xf32, #tpu.memory_space<vmem>>, vector<64x16xf32>
    %6 = arith.truncf %5 : vector<64x16xf32> to vector<64x16xbf16>
    %cst = arith.constant dense<0.000000e+00> : vector<64x128xf32>
    %7 = tpu.matmul %6, %2, %cst {dimension_numbers = #tpu.dot_dimension_numbers<[1], [0], [0], [1], [0, 0, 1, 1], [], []>} : vector<64x16xbf16>, vector<16x128xbf16>, vector<64x128xf32> -> vector<64x128xf32>
    %c0_3 = arith.constant 0 : index
    %c0_4 = arith.constant 0 : index
    %8 = vector.load %arg3[%c0_3, %c0_4] : memref<1x128xf32, #tpu.memory_space<vmem>>, vector<1x128xf32>
    %9 = vector.broadcast %8 : vector<1x128xf32> to vector<64x128xf32>
    %10 = arith.addf %7, %9 : vector<64x128xf32>
    %c0_5 = arith.constant 0 : index
    %c0_6 = arith.constant 0 : index
    %c0_7 = arith.constant 0 : index
    %11 = vector.load %arg1[%c0_5, %c0_6, %c0_7] : memref<2x8x32xf32, #tpu.memory_space<vmem>>, vector<1x8x32xf32>
    %12 = vector.shape_cast %11 : vector<1x8x32xf32> to vector<8x32xf32>
    %c1 = arith.constant 1 : index
    %c0_8 = arith.constant 0 : index
    %c0_9 = arith.constant 0 : index
    %13 = vector.load %arg1[%c1, %c0_8, %c0_9] : memref<2x8x32xf32, #tpu.memory_space<vmem>>, vector<1x8x32xf32>
    %14 = vector.shape_cast %13 : vector<1x8x32xf32> to vector<8x32xf32>
    %15 = vector.extract_strided_slice %10 {offsets = [0, 0], sizes = [8, 128], strides = [1, 1]} : vector<64x128xf32> to vector<8x128xf32>
    %16 = arith.truncf %12 : vector<8x32xf32> to vector<8x32xbf16>
    %cst_10 = arith.constant dense<0.000000e+00> : vector<8x128xf32>
    %17 = tpu.matmul %16, %4, %cst_10 {dimension_numbers = #tpu.dot_dimension_numbers<[1], [0], [0], [1], [0, 0, 1, 1], [], []>} : vector<8x32xbf16>, vector<32x128xbf16>, vector<8x128xf32> -> vector<8x128xf32>
    %18 = arith.addf %15, %17 : vector<8x128xf32>
    %19 = arith.negf %18 : vector<8x128xf32>
    %20 = math.exp %19 : vector<8x128xf32>
    %cst_11 = arith.constant 1.000000e+00 : f32
    %21 = vector.broadcast %cst_11 : f32 to vector<8x128xf32>
    %22 = arith.addf %21, %20 : vector<8x128xf32>
    %23 = arith.divf %21, %22 : vector<8x128xf32>
    %24 = math.tanh %18 : vector<8x128xf32>
    %25 = vector.extract_strided_slice %23 {offsets = [0, 0], sizes = [8, 32], strides = [1, 1]} : vector<8x128xf32> to vector<8x32xf32>
    %26 = vector.extract_strided_slice %23 {offsets = [0, 32], sizes = [8, 32], strides = [1, 1]} : vector<8x128xf32> to vector<8x32xf32>
    %27 = vector.extract_strided_slice %24 {offsets = [0, 64], sizes = [8, 32], strides = [1, 1]} : vector<8x128xf32> to vector<8x32xf32>
    %28 = vector.extract_strided_slice %23 {offsets = [0, 96], sizes = [8, 32], strides = [1, 1]} : vector<8x128xf32> to vector<8x32xf32>
    %29 = arith.mulf %26, %14 : vector<8x32xf32>
    %30 = arith.mulf %25, %27 : vector<8x32xf32>
    %31 = arith.addf %29, %30 : vector<8x32xf32>
    %32 = math.tanh %31 : vector<8x32xf32>
    %33 = arith.mulf %28, %32 : vector<8x32xf32>
    %34 = vector.extract_strided_slice %10 {offsets = [8, 0], sizes = [8, 128], strides = [1, 1]} : vector<64x128xf32> to vector<8x128xf32>
    %35 = arith.truncf %33 : vector<8x32xf32> to vector<8x32xbf16>
    %cst_12 = arith.constant dense<0.000000e+00> : vector<8x128xf32>
    %36 = tpu.matmul %35, %4, %cst_12 {dimension_numbers = #tpu.dot_dimension_numbers<[1], [0], [0], [1], [0, 0, 1, 1], [], []>} : vector<8x32xbf16>, vector<32x128xbf16>, vector<8x128xf32> -> vector<8x128xf32>
    %37 = arith.addf %34, %36 : vector<8x128xf32>
    %38 = arith.negf %37 : vector<8x128xf32>
    %39 = math.exp %38 : vector<8x128xf32>
    %cst_13 = arith.constant 1.000000e+00 : f32
    %40 = vector.broadcast %cst_13 : f32 to vector<8x128xf32>
    %41 = arith.addf %40, %39 : vector<8x128xf32>
    %42 = arith.divf %40, %41 : vector<8x128xf32>
    %43 = math.tanh %37 : vector<8x128xf32>
    %44 = vector.extract_strided_slice %42 {offsets = [0, 0], sizes = [8, 32], strides = [1, 1]} : vector<8x128xf32> to vector<8x32xf32>
    %45 = vector.extract_strided_slice %42 {offsets = [0, 32], sizes = [8, 32], strides = [1, 1]} : vector<8x128xf32> to vector<8x32xf32>
    %46 = vector.extract_strided_slice %43 {offsets = [0, 64], sizes = [8, 32], strides = [1, 1]} : vector<8x128xf32> to vector<8x32xf32>
    %47 = vector.extract_strided_slice %42 {offsets = [0, 96], sizes = [8, 32], strides = [1, 1]} : vector<8x128xf32> to vector<8x32xf32>
    %48 = arith.mulf %45, %31 : vector<8x32xf32>
    %49 = arith.mulf %44, %46 : vector<8x32xf32>
    %50 = arith.addf %48, %49 : vector<8x32xf32>
    %51 = math.tanh %50 : vector<8x32xf32>
    %52 = arith.mulf %47, %51 : vector<8x32xf32>
    %53 = vector.extract_strided_slice %10 {offsets = [16, 0], sizes = [8, 128], strides = [1, 1]} : vector<64x128xf32> to vector<8x128xf32>
    %54 = arith.truncf %52 : vector<8x32xf32> to vector<8x32xbf16>
    %cst_14 = arith.constant dense<0.000000e+00> : vector<8x128xf32>
    %55 = tpu.matmul %54, %4, %cst_14 {dimension_numbers = #tpu.dot_dimension_numbers<[1], [0], [0], [1], [0, 0, 1, 1], [], []>} : vector<8x32xbf16>, vector<32x128xbf16>, vector<8x128xf32> -> vector<8x128xf32>
    %56 = arith.addf %53, %55 : vector<8x128xf32>
    %57 = arith.negf %56 : vector<8x128xf32>
    %58 = math.exp %57 : vector<8x128xf32>
    %cst_15 = arith.constant 1.000000e+00 : f32
    %59 = vector.broadcast %cst_15 : f32 to vector<8x128xf32>
    %60 = arith.addf %59, %58 : vector<8x128xf32>
    %61 = arith.divf %59, %60 : vector<8x128xf32>
    %62 = math.tanh %56 : vector<8x128xf32>
    %63 = vector.extract_strided_slice %61 {offsets = [0, 0], sizes = [8, 32], strides = [1, 1]} : vector<8x128xf32> to vector<8x32xf32>
    %64 = vector.extract_strided_slice %61 {offsets = [0, 32], sizes = [8, 32], strides = [1, 1]} : vector<8x128xf32> to vector<8x32xf32>
    %65 = vector.extract_strided_slice %62 {offsets = [0, 64], sizes = [8, 32], strides = [1, 1]} : vector<8x128xf32> to vector<8x32xf32>
    %66 = vector.extract_strided_slice %61 {offsets = [0, 96], sizes = [8, 32], strides = [1, 1]} : vector<8x128xf32> to vector<8x32xf32>
    %67 = arith.mulf %64, %50 : vector<8x32xf32>
    %68 = arith.mulf %63, %65 : vector<8x32xf32>
    %69 = arith.addf %67, %68 : vector<8x32xf32>
    %70 = math.tanh %69 : vector<8x32xf32>
    %71 = arith.mulf %66, %70 : vector<8x32xf32>
    %72 = vector.extract_strided_slice %10 {offsets = [24, 0], sizes = [8, 128], strides = [1, 1]} : vector<64x128xf32> to vector<8x128xf32>
    %73 = arith.truncf %71 : vector<8x32xf32> to vector<8x32xbf16>
    %cst_16 = arith.constant dense<0.000000e+00> : vector<8x128xf32>
    %74 = tpu.matmul %73, %4, %cst_16 {dimension_numbers = #tpu.dot_dimension_numbers<[1], [0], [0], [1], [0, 0, 1, 1], [], []>} : vector<8x32xbf16>, vector<32x128xbf16>, vector<8x128xf32> -> vector<8x128xf32>
    %75 = arith.addf %72, %74 : vector<8x128xf32>
    %76 = arith.negf %75 : vector<8x128xf32>
    %77 = math.exp %76 : vector<8x128xf32>
    %cst_17 = arith.constant 1.000000e+00 : f32
    %78 = vector.broadcast %cst_17 : f32 to vector<8x128xf32>
    %79 = arith.addf %78, %77 : vector<8x128xf32>
    %80 = arith.divf %78, %79 : vector<8x128xf32>
    %81 = math.tanh %75 : vector<8x128xf32>
    %82 = vector.extract_strided_slice %80 {offsets = [0, 0], sizes = [8, 32], strides = [1, 1]} : vector<8x128xf32> to vector<8x32xf32>
    %83 = vector.extract_strided_slice %80 {offsets = [0, 32], sizes = [8, 32], strides = [1, 1]} : vector<8x128xf32> to vector<8x32xf32>
    %84 = vector.extract_strided_slice %81 {offsets = [0, 64], sizes = [8, 32], strides = [1, 1]} : vector<8x128xf32> to vector<8x32xf32>
    %85 = vector.extract_strided_slice %80 {offsets = [0, 96], sizes = [8, 32], strides = [1, 1]} : vector<8x128xf32> to vector<8x32xf32>
    %86 = arith.mulf %83, %69 : vector<8x32xf32>
    %87 = arith.mulf %82, %84 : vector<8x32xf32>
    %88 = arith.addf %86, %87 : vector<8x32xf32>
    %89 = math.tanh %88 : vector<8x32xf32>
    %90 = arith.mulf %85, %89 : vector<8x32xf32>
    %91 = vector.extract_strided_slice %10 {offsets = [32, 0], sizes = [8, 128], strides = [1, 1]} : vector<64x128xf32> to vector<8x128xf32>
    %92 = arith.truncf %90 : vector<8x32xf32> to vector<8x32xbf16>
    %cst_18 = arith.constant dense<0.000000e+00> : vector<8x128xf32>
    %93 = tpu.matmul %92, %4, %cst_18 {dimension_numbers = #tpu.dot_dimension_numbers<[1], [0], [0], [1], [0, 0, 1, 1], [], []>} : vector<8x32xbf16>, vector<32x128xbf16>, vector<8x128xf32> -> vector<8x128xf32>
    %94 = arith.addf %91, %93 : vector<8x128xf32>
    %95 = arith.negf %94 : vector<8x128xf32>
    %96 = math.exp %95 : vector<8x128xf32>
    %cst_19 = arith.constant 1.000000e+00 : f32
    %97 = vector.broadcast %cst_19 : f32 to vector<8x128xf32>
    %98 = arith.addf %97, %96 : vector<8x128xf32>
    %99 = arith.divf %97, %98 : vector<8x128xf32>
    %100 = math.tanh %94 : vector<8x128xf32>
    %101 = vector.extract_strided_slice %99 {offsets = [0, 0], sizes = [8, 32], strides = [1, 1]} : vector<8x128xf32> to vector<8x32xf32>
    %102 = vector.extract_strided_slice %99 {offsets = [0, 32], sizes = [8, 32], strides = [1, 1]} : vector<8x128xf32> to vector<8x32xf32>
    %103 = vector.extract_strided_slice %100 {offsets = [0, 64], sizes = [8, 32], strides = [1, 1]} : vector<8x128xf32> to vector<8x32xf32>
    %104 = vector.extract_strided_slice %99 {offsets = [0, 96], sizes = [8, 32], strides = [1, 1]} : vector<8x128xf32> to vector<8x32xf32>
    %105 = arith.mulf %102, %88 : vector<8x32xf32>
    %106 = arith.mulf %101, %103 : vector<8x32xf32>
    %107 = arith.addf %105, %106 : vector<8x32xf32>
    %108 = math.tanh %107 : vector<8x32xf32>
    %109 = arith.mulf %104, %108 : vector<8x32xf32>
    %110 = vector.extract_strided_slice %10 {offsets = [40, 0], sizes = [8, 128], strides = [1, 1]} : vector<64x128xf32> to vector<8x128xf32>
    %111 = arith.truncf %109 : vector<8x32xf32> to vector<8x32xbf16>
    %cst_20 = arith.constant dense<0.000000e+00> : vector<8x128xf32>
    %112 = tpu.matmul %111, %4, %cst_20 {dimension_numbers = #tpu.dot_dimension_numbers<[1], [0], [0], [1], [0, 0, 1, 1], [], []>} : vector<8x32xbf16>, vector<32x128xbf16>, vector<8x128xf32> -> vector<8x128xf32>
    %113 = arith.addf %110, %112 : vector<8x128xf32>
    %114 = arith.negf %113 : vector<8x128xf32>
    %115 = math.exp %114 : vector<8x128xf32>
    %cst_21 = arith.constant 1.000000e+00 : f32
    %116 = vector.broadcast %cst_21 : f32 to vector<8x128xf32>
    %117 = arith.addf %116, %115 : vector<8x128xf32>
    %118 = arith.divf %116, %117 : vector<8x128xf32>
    %119 = math.tanh %113 : vector<8x128xf32>
    %120 = vector.extract_strided_slice %118 {offsets = [0, 0], sizes = [8, 32], strides = [1, 1]} : vector<8x128xf32> to vector<8x32xf32>
    %121 = vector.extract_strided_slice %118 {offsets = [0, 32], sizes = [8, 32], strides = [1, 1]} : vector<8x128xf32> to vector<8x32xf32>
    %122 = vector.extract_strided_slice %119 {offsets = [0, 64], sizes = [8, 32], strides = [1, 1]} : vector<8x128xf32> to vector<8x32xf32>
    %123 = vector.extract_strided_slice %118 {offsets = [0, 96], sizes = [8, 32], strides = [1, 1]} : vector<8x128xf32> to vector<8x32xf32>
    %124 = arith.mulf %121, %107 : vector<8x32xf32>
    %125 = arith.mulf %120, %122 : vector<8x32xf32>
    %126 = arith.addf %124, %125 : vector<8x32xf32>
    %127 = math.tanh %126 : vector<8x32xf32>
    %128 = arith.mulf %123, %127 : vector<8x32xf32>
    %129 = vector.extract_strided_slice %10 {offsets = [48, 0], sizes = [8, 128], strides = [1, 1]} : vector<64x128xf32> to vector<8x128xf32>
    %130 = arith.truncf %128 : vector<8x32xf32> to vector<8x32xbf16>
    %cst_22 = arith.constant dense<0.000000e+00> : vector<8x128xf32>
    %131 = tpu.matmul %130, %4, %cst_22 {dimension_numbers = #tpu.dot_dimension_numbers<[1], [0], [0], [1], [0, 0, 1, 1], [], []>} : vector<8x32xbf16>, vector<32x128xbf16>, vector<8x128xf32> -> vector<8x128xf32>
    %132 = arith.addf %129, %131 : vector<8x128xf32>
    %133 = arith.negf %132 : vector<8x128xf32>
    %134 = math.exp %133 : vector<8x128xf32>
    %cst_23 = arith.constant 1.000000e+00 : f32
    %135 = vector.broadcast %cst_23 : f32 to vector<8x128xf32>
    %136 = arith.addf %135, %134 : vector<8x128xf32>
    %137 = arith.divf %135, %136 : vector<8x128xf32>
    %138 = math.tanh %132 : vector<8x128xf32>
    %139 = vector.extract_strided_slice %137 {offsets = [0, 0], sizes = [8, 32], strides = [1, 1]} : vector<8x128xf32> to vector<8x32xf32>
    %140 = vector.extract_strided_slice %137 {offsets = [0, 32], sizes = [8, 32], strides = [1, 1]} : vector<8x128xf32> to vector<8x32xf32>
    %141 = vector.extract_strided_slice %138 {offsets = [0, 64], sizes = [8, 32], strides = [1, 1]} : vector<8x128xf32> to vector<8x32xf32>
    %142 = vector.extract_strided_slice %137 {offsets = [0, 96], sizes = [8, 32], strides = [1, 1]} : vector<8x128xf32> to vector<8x32xf32>
    %143 = arith.mulf %140, %126 : vector<8x32xf32>
    %144 = arith.mulf %139, %141 : vector<8x32xf32>
    %145 = arith.addf %143, %144 : vector<8x32xf32>
    %146 = math.tanh %145 : vector<8x32xf32>
    %147 = arith.mulf %142, %146 : vector<8x32xf32>
    %148 = vector.extract_strided_slice %10 {offsets = [56, 0], sizes = [8, 128], strides = [1, 1]} : vector<64x128xf32> to vector<8x128xf32>
    %149 = arith.truncf %147 : vector<8x32xf32> to vector<8x32xbf16>
    %cst_24 = arith.constant dense<0.000000e+00> : vector<8x128xf32>
    %150 = tpu.matmul %149, %4, %cst_24 {dimension_numbers = #tpu.dot_dimension_numbers<[1], [0], [0], [1], [0, 0, 1, 1], [], []>} : vector<8x32xbf16>, vector<32x128xbf16>, vector<8x128xf32> -> vector<8x128xf32>
    %151 = arith.addf %148, %150 : vector<8x128xf32>
    %152 = arith.negf %151 : vector<8x128xf32>
    %153 = math.exp %152 : vector<8x128xf32>
    %cst_25 = arith.constant 1.000000e+00 : f32
    %154 = vector.broadcast %cst_25 : f32 to vector<8x128xf32>
    %155 = arith.addf %154, %153 : vector<8x128xf32>
    %156 = arith.divf %154, %155 : vector<8x128xf32>
    %157 = math.tanh %151 : vector<8x128xf32>
    %158 = vector.extract_strided_slice %156 {offsets = [0, 0], sizes = [8, 32], strides = [1, 1]} : vector<8x128xf32> to vector<8x32xf32>
    %159 = vector.extract_strided_slice %156 {offsets = [0, 32], sizes = [8, 32], strides = [1, 1]} : vector<8x128xf32> to vector<8x32xf32>
    %160 = vector.extract_strided_slice %157 {offsets = [0, 64], sizes = [8, 32], strides = [1, 1]} : vector<8x128xf32> to vector<8x32xf32>
    %161 = vector.extract_strided_slice %156 {offsets = [0, 96], sizes = [8, 32], strides = [1, 1]} : vector<8x128xf32> to vector<8x32xf32>
    %162 = arith.mulf %159, %145 : vector<8x32xf32>
    %163 = arith.mulf %158, %160 : vector<8x32xf32>
    %164 = arith.addf %162, %163 : vector<8x32xf32>
    %165 = math.tanh %164 : vector<8x32xf32>
    %166 = arith.mulf %161, %165 : vector<8x32xf32>
    %c0_26 = arith.constant 0 : index
    %c0_27 = arith.constant 0 : index
    %c0_28 = arith.constant 0 : index
    %167 = vector.load %arg7[%c0_26, %c0_27, %c0_28] : memref<2x8x32xf32, #tpu.memory_space<vmem>>, vector<1x8x32xf32>
    %168 = vector.shape_cast %167 : vector<1x8x32xf32> to vector<8x32xf32>
    %169 = vector.shape_cast %166 : vector<8x32xf32> to vector<1x8x32xf32>
    tpu.vector_store %arg7[%c0_26, %c0_27, %c0_28], %169 {strides = array<i32>} : memref<2x8x32xf32, #tpu.memory_space<vmem>>, vector<1x8x32xf32>,
    %c1_29 = arith.constant 1 : index
    %c0_30 = arith.constant 0 : index
    %c0_31 = arith.constant 0 : index
    %170 = vector.load %arg7[%c1_29, %c0_30, %c0_31] : memref<2x8x32xf32, #tpu.memory_space<vmem>>, vector<1x8x32xf32>
    %171 = vector.shape_cast %170 : vector<1x8x32xf32> to vector<8x32xf32>
    %172 = vector.shape_cast %164 : vector<8x32xf32> to vector<1x8x32xf32>
    tpu.vector_store %arg7[%c1_29, %c0_30, %c0_31], %172 {strides = array<i32>} : memref<2x8x32xf32, #tpu.memory_space<vmem>>, vector<1x8x32xf32>,
    %173 = tpu.concatenate %33, %52, %71, %90, %109, %128, %147, %166 in 0 : vector<8x32xf32>, vector<8x32xf32>, vector<8x32xf32>, vector<8x32xf32>, vector<8x32xf32>, vector<8x32xf32>, vector<8x32xf32>, vector<8x32xf32> -> vector<64x32xf32>
    %174 = arith.truncf %173 : vector<64x32xf32> to vector<64x32xbf16>
    %c0_32 = arith.constant 0 : index
    %c0_33 = arith.constant 0 : index
    %175 = vector.load %arg4[%c0_32, %c0_33] : memref<32x128xf32, #tpu.memory_space<vmem>>, vector<32x128xf32>
    %176 = arith.truncf %175 : vector<32x128xf32> to vector<32x128xbf16>
    %cst_34 = arith.constant dense<0.000000e+00> : vector<64x128xf32>
    %177 = tpu.matmul %174, %176, %cst_34 {dimension_numbers = #tpu.dot_dimension_numbers<[1], [0], [0], [1], [0, 0, 1, 1], [], []>} : vector<64x32xbf16>, vector<32x128xbf16>, vector<64x128xf32> -> vector<64x128xf32>
    %c0_35 = arith.constant 0 : index
    %c0_36 = arith.constant 0 : index
    %178 = vector.load %arg5[%c0_35, %c0_36] : memref<1x128xf32, #tpu.memory_space<vmem>>, vector<1x128xf32>
    %179 = vector.broadcast %178 : vector<1x128xf32> to vector<64x128xf32>
    %180 = arith.addf %177, %179 : vector<64x128xf32>
    %c0_37 = arith.constant 0 : index
    %c0_38 = arith.constant 0 : index
    %181 = vector.load %arg6[%c0_37, %c0_38] : memref<64x128xf32, #tpu.memory_space<vmem>>, vector<64x128xf32>
    tpu.vector_store %arg6[%c0_37, %c0_38], %180 {strides = array<i32>} : memref<64x128xf32, #tpu.memory_space<vmem>>, vector<64x128xf32>,
    return
  }
}

</mosaic_0001>

<llo_original>
// kernel: decoder_net_forward.1
$region0: #{decoder_net_forward.1}
  #allocation0 [shape = 'u32[]', space=smem, size = 0x4, offset = 0x4, fixed_abs, tag = 'smem constant byte address 0x4 - core index']
  #allocation1 [shape = 'u32[144,128]{1,0:T(1,128)}', space=vmem, size = 0x12000, scoped, tag = 'internal scratch']
  %s0 = inlined_call_operand.vmem [shape: f32[64,16], index: 0, kind: input, shape index: {}]
  %s1 = inlined_call_operand.vmem [shape: f32[2,8,32], index: 1, kind: input, shape index: {}]
  %s2 = inlined_call_operand.vmem [shape: f32[48,128], index: 2, kind: input, shape index: {}]
  %s3 = inlined_call_operand.vmem [shape: f32[1,128], index: 3, kind: input, shape index: {}]
  %s4 = inlined_call_operand.vmem [shape: f32[32,128], index: 4, kind: input, shape index: {}]
  %s5 = inlined_call_operand.vmem [shape: f32[1,128], index: 5, kind: input, shape index: {}]
  %s6 = inlined_call_operand.vmem [shape: f32[64,128], index: 6, kind: output, shape index: {0}]
  %s7 = inlined_call_operand.vmem [shape: f32[2,8,32], index: 7, kind: output, shape index: {1}]
  %8 = xla_tuple %s6, %s7
  %s9 = sld [smem:[#allocation0]]
  $region42: #{decoder_net_forward.1} parent=0
    _
  %s11 = ssub.s32 1, %s9
  %s12 = scalar_select 0, %s11, %s9
  // Predicated region
  $region2: #{decoder_net_forward.1} parent=0 // pred_check
    _
  $region3: #{decoder_net_forward.1} parent=0 // pred_check_branch
    %14 = sbr.rel (0) target = $region5
  $region4: #{decoder_net_forward.1} parent=0 // pred_region
    _
  $region5: #{decoder_net_forward.1} parent=0 // pred_fallthru
    _
  // Predicated region
  $region6: #{decoder_net_forward.1} parent=0 // pred_check
    _
  $region7: #{decoder_net_forward.1} parent=0 // pred_check_branch
    %16 = sbr.rel (0) target = $region9
  $region8: #{decoder_net_forward.1} parent=0 // pred_region
    _
  $region9: #{decoder_net_forward.1} parent=0 // pred_fallthru
    _
  // Predicated region
  $region10: #{decoder_net_forward.1} parent=0 // pred_check
    _
  $region11: #{decoder_net_forward.1} parent=0 // pred_check_branch
    %18 = sbr.rel (0) target = $region13
  $region12: #{decoder_net_forward.1} parent=0 // pred_region
    _
  $region13: #{decoder_net_forward.1} parent=0 // pred_fallthru
    _
  // Predicated region
  $region14: #{decoder_net_forward.1} parent=0 // pred_check
    _
  $region15: #{decoder_net_forward.1} parent=0 // pred_check_branch
    %20 = sbr.rel (0) target = $region17
  $region16: #{decoder_net_forward.1} parent=0 // pred_region
    _
  $region17: #{decoder_net_forward.1} parent=0 // pred_fallthru
    _
  // Predicated region
  $region18: #{decoder_net_forward.1} parent=0 // pred_check
    _
  $region19: #{decoder_net_forward.1} parent=0 // pred_check_branch
    %22 = sbr.rel (0) target = $region21
  $region20: #{decoder_net_forward.1} parent=0 // pred_region
    _
  $region21: #{decoder_net_forward.1} parent=0 // pred_fallthru
    _
  // Predicated region
  $region22: #{decoder_net_forward.1} parent=0 // pred_check
    _
  $region23: #{decoder_net_forward.1} parent=0 // pred_check_branch
    %24 = sbr.rel (0) target = $region25
  $region24: #{decoder_net_forward.1} parent=0 // pred_region
    _
  $region25: #{decoder_net_forward.1} parent=0 // pred_fallthru
    _
  %v26 = vld [vmem:[%s2] sm:$0xff]
  %v27 = vld [vmem:[%s2 + $0x8] sm:$0xff]
  %v28 = vld [vmem:[%s2 + $0x10] sm:$0xff]
  %v29 = vld [vmem:[%s2 + $0x18] sm:$0xff]
  %v30 = vld [vmem:[%s2 + $0x20] sm:$0xff]
  %v31 = vld [vmem:[%s2 + $0x28] sm:$0xff]
  %v32 = vpack.c.bf16 %v27, %v26
  %v33 = vpack.c.bf16 %v29, %v28
  %v34 = vpack.c.bf16 %v31, %v30
  %v35 = vld [vmem:[%s0] sm:$0xff]
  %v36 = vld [vmem:[%s0 + $0x8] sm:$0xff]
  %v37 = vld [vmem:[%s0 + $0x10] sm:$0xff]
  %v38 = vld [vmem:[%s0 + $0x18] sm:$0xff]
  %v39 = vld [vmem:[%s0 + $0x20] sm:$0xff]
  %v40 = vld [vmem:[%s0 + $0x28] sm:$0xff]
  %v41 = vld [vmem:[%s0 + $0x30] sm:$0xff]
  %v42 = vld [vmem:[%s0 + $0x38] sm:$0xff]
  %v43 = vpack.c.bf16 %v36, %v35
  %v44 = vpack.c.bf16 %v38, %v37
  %v45 = vpack.c.bf16 %v40, %v39
  %v46 = vpack.c.bf16 %v42, %v41
  %v47 = vld [vmem:[%s3] sm:$0x1]
  %v49 = vlaneseq
  %v50 = vshrl.u32 %v49, 7
  %v51 = vsub.s32 0, %v50
  %v52 = vrot.slane %v47, %v51
  %vm54 = vcmask 130048
  %v56 = vsel %vm54, %v43, 0
  %v59 = vsel %vm54, %v44, 0
  %v62 = vsel %vm54, %v45, 0
  %v65 = vsel %vm54, %v46, 0
  %67 = vmatprep.subr.bf16.mxu0 0
  %68 = vmatpush1.bf16.msra.mxu0 0
  %69 = vmatprep.subr.bf16.mxu0 0
  %70 = vmatpush1.bf16.msra.mxu0 0
  %71 = vmatprep.subr.bf16.mxu0 0
  %72 = vmatpush1.bf16.msra.mxu0 0
  %73 = vmatprep.subr.bf16.mxu0 0
  %74 = vmatpush1.bf16.msra.mxu0 0
  %75 = vmatprep.subr.bf16.mxu0 0
  %76 = vmatpush1.bf16.msra.mxu0 0
  %77 = vmatprep.subr.bf16.mxu0 0
  %78 = vmatpush1.bf16.msra.mxu0 0
  %79 = vmatprep.subr.bf16.mxu0 0
  %80 = vmatpush1.bf16.msra.mxu0 0
  %81 = vmatprep.subr.bf16.mxu0 0
  %82 = vmatpush1.bf16.msra.mxu0 %v32
  %83 = vmatprep.subr.bf16.mxu0 0
  %84 = vmatpush2.bf16.msra.mxu0 0
  %85 = vmatprep.subr.bf16.mxu0 0
  %86 = vmatpush2.bf16.msra.mxu0 0
  %87 = vmatprep.subr.bf16.mxu0 0
  %88 = vmatpush2.bf16.msra.mxu0 0
  %89 = vmatprep.subr.bf16.mxu0 0
  %90 = vmatpush2.bf16.msra.mxu0 0
  %91 = vmatprep.subr.bf16.mxu0 0
  %92 = vmatpush2.bf16.msra.mxu0 0
  %93 = vmatprep.subr.bf16.mxu0 0
  %94 = vmatpush2.bf16.msra.mxu0 0
  %95 = vmatprep.subr.bf16.mxu0 0
  %96 = vmatpush2.bf16.msra.mxu0 0
  %97 = vmatprep.subr.bf16.mxu0 0
  %98 = vmatpush2.bf16.msra.mxu0 0
  %99 = vmatprep.mubr.bf16.mxu0 0
  %100 = vmatmul.mubr.bf16.gmra.mxu0 %v56
  %v101 = vpop.f32.mrf.mxu0
  %v102 = vadd.f32 %v52, %v101
  %v103 = vpop.f32.mrf.mxu0
  %v104 = vpop.f32.mrf.mxu0
  %v105 = vadd.f32 %v52, %v104
  %v106 = vpop.f32.mrf.mxu0
  %107 = vmatprep.mubr.bf16.mxu0 0
  %108 = vmatmul.mubr.bf16.gmra.mxu0 %v59
  %v109 = vpop.f32.mrf.mxu0
  %v110 = vadd.f32 %v52, %v109
  %v111 = vpop.f32.mrf.mxu0
  %v112 = vpop.f32.mrf.mxu0
  %v113 = vadd.f32 %v52, %v112
  %v114 = vpop.f32.mrf.mxu0
  %115 = vmatprep.mubr.bf16.mxu0 0
  %116 = vmatmul.mubr.bf16.gmra.mxu0 %v62
  %v117 = vpop.f32.mrf.mxu0
  %v118 = vadd.f32 %v52, %v117
  %v119 = vpop.f32.mrf.mxu0
  %v120 = vpop.f32.mrf.mxu0
  %v121 = vadd.f32 %v52, %v120
  %v122 = vpop.f32.mrf.mxu0
  %123 = vmatprep.mubr.bf16.mxu0 0
  %124 = vmatmul.mubr.bf16.gmra.mxu0 %v65
  %v125 = vpop.f32.mrf.mxu0
  %v126 = vadd.f32 %v52, %v125
  %v127 = vpop.f32.mrf.mxu0
  %v128 = vpop.f32.mrf.mxu0
  %v129 = vadd.f32 %v52, %v128
  %v130 = vpop.f32.mrf.mxu0
  %131 = vdwg.mxu0
  %v132 = vld [vmem:[%s1] sm:$0xff]
  %s133 = scalar_lea.vmem %s1, 8
  %v134 = vld [vmem:[%s133] sm:$0xff]
  %v135 = vpack.c.bf16 %v132, %v132
  %vm136 = vcmask 261120
  %v138 = vsel %vm136, %v135, 0
  %140 = vmatprep.subr.bf16.mxu0 0
  %141 = vmatpush1.bf16.msra.mxu0 0
  %142 = vmatprep.subr.bf16.mxu0 0
  %143 = vmatpush1.bf16.msra.mxu0 0
  %144 = vmatprep.subr.bf16.mxu0 0
  %145 = vmatpush1.bf16.msra.mxu0 0
  %146 = vmatprep.subr.bf16.mxu0 0
  %147 = vmatpush1.bf16.msra.mxu0 0
  %148 = vmatprep.subr.bf16.mxu0 0
  %149 = vmatpush1.bf16.msra.mxu0 0
  %150 = vmatprep.subr.bf16.mxu0 0
  %151 = vmatpush1.bf16.msra.mxu0 0
  %152 = vmatprep.subr.bf16.mxu0 0
  %153 = vmatpush1.bf16.msra.mxu0 %v34
  %154 = vmatprep.subr.bf16.mxu0 0
  %155 = vmatpush1.bf16.msra.mxu0 %v33
  %156 = vmatprep.subr.bf16.mxu0 0
  %157 = vmatpush2.bf16.msra.mxu0 0
  %158 = vmatprep.subr.bf16.mxu0 0
  %159 = vmatpush2.bf16.msra.mxu0 0
  %160 = vmatprep.subr.bf16.mxu0 0
  %161 = vmatpush2.bf16.msra.mxu0 0
  %162 = vmatprep.subr.bf16.mxu0 0
  %163 = vmatpush2.bf16.msra.mxu0 0
  %164 = vmatprep.subr.bf16.mxu0 0
  %165 = vmatpush2.bf16.msra.mxu0 0
  %166 = vmatprep.subr.bf16.mxu0 0
  %167 = vmatpush2.bf16.msra.mxu0 0
  %168 = vmatprep.subr.bf16.mxu0 0
  %169 = vmatpush2.bf16.msra.mxu0 0
  %170 = vmatprep.subr.bf16.mxu0 0
  %171 = vmatpush2.bf16.msra.mxu0 0
  %172 = vmatprep.mubr.bf16.mxu0 0
  %173 = vmatmul.mubr.bf16.gmra.mxu0 %v138
  %v174 = vpop.f32.mrf.mxu0
  %v175 = vadd.f32 0.0, %v174
  %v176 = vpop.f32.mrf.mxu0
  %v177 = vpop.f32.mrf.mxu0
  %v178 = vpop.f32.mrf.mxu0
  %179 = vdwg.mxu0
  %v180 = vadd.f32 %v102, %v175
  %v181 = vxor.u32 %v180, 2147483648
  %v182 = vmul.f32 %v181, 1.442695
  %v183 = vpow.pop %v182
  %v184 = vadd.f32 %v183, 1.0
  %v185 = vrcp.pop %v184
  %v186 = vmul.f32 1.0, %v185
  %v187 = vtanh.pop %v180
  %189 = vrot.lane.b32.xlu0 %v134, 32
  %v190 = vpop.permute.xlu0 %189
  %v192 = vmul.f32 %v186, %v190
  %194 = vrot.lane.b32.xlu0 %v187, 64
  %v195 = vpop.permute.xlu0 %194
  %v197 = vmul.f32 %v186, %v195
  %199 = vrot.lane.b32.xlu0 %v197, 32
  %v200 = vpop.permute.xlu0 %199
  %v202 = vadd.f32 %v192, %v200
  %v203 = vtanh.pop %v202
  %205 = vrot.lane.b32.xlu0 %v203, 64
  %v206 = vpop.permute.xlu0 %205
  %v208 = vmul.f32 %v186, %v206
  %v209 = vpack.c.bf16 %v208, %v208
  %211 = vrot.lane.b32.xlu0 %v209, 32
  %v212 = vpop.permute.xlu0 %211
  %v214 = vsel %vm136, %v212, 0
  %216 = vmatprep.subr.bf16.mxu0 0
  %217 = vmatpush1.bf16.msra.mxu0 0
  %218 = vmatprep.subr.bf16.mxu0 0
  %219 = vmatpush1.bf16.msra.mxu0 0
  %220 = vmatprep.subr.bf16.mxu0 0
  %221 = vmatpush1.bf16.msra.mxu0 0
  %222 = vmatprep.subr.bf16.mxu0 0
  %223 = vmatpush1.bf16.msra.mxu0 0
  %224 = vmatprep.subr.bf16.mxu0 0
  %225 = vmatpush1.bf16.msra.mxu0 0
  %226 = vmatprep.subr.bf16.mxu0 0
  %227 = vmatpush1.bf16.msra.mxu0 0
  %228 = vmatprep.subr.bf16.mxu0 0
  %229 = vmatpush1.bf16.msra.mxu0 %v34
  %230 = vmatprep.subr.bf16.mxu0 0
  %231 = vmatpush1.bf16.msra.mxu0 %v33
  %232 = vmatprep.subr.bf16.mxu0 0
  %233 = vmatpush2.bf16.msra.mxu0 0
  %234 = vmatprep.subr.bf16.mxu0 0
  %235 = vmatpush2.bf16.msra.mxu0 0
  %236 = vmatprep.subr.bf16.mxu0 0
  %237 = vmatpush2.bf16.msra.mxu0 0
  %238 = vmatprep.subr.bf16.mxu0 0
  %239 = vmatpush2.bf16.msra.mxu0 0
  %240 = vmatprep.subr.bf16.mxu0 0
  %241 = vmatpush2.bf16.msra.mxu0 0
  %242 = vmatprep.subr.bf16.mxu0 0
  %243 = vmatpush2.bf16.msra.mxu0 0
  %244 = vmatprep.subr.bf16.mxu0 0
  %245 = vmatpush2.bf16.msra.mxu0 0
  %246 = vmatprep.subr.bf16.mxu0 0
  %247 = vmatpush2.bf16.msra.mxu0 0
  %248 = vmatprep.mubr.bf16.mxu0 0
  %249 = vmatmul.mubr.bf16.gmra.mxu0 %v214
  %v250 = vpop.f32.mrf.mxu0
  %v251 = vadd.f32 0.0, %v250
  %v252 = vpop.f32.mrf.mxu0
  %v253 = vpop.f32.mrf.mxu0
  %v254 = vpop.f32.mrf.mxu0
  %255 = vdwg.mxu0
  %v256 = vadd.f32 %v105, %v251
  %v257 = vxor.u32 %v256, 2147483648
  %v258 = vmul.f32 %v257, 1.442695
  %v259 = vpow.pop %v258
  %v260 = vadd.f32 %v259, 1.0
  %v261 = vrcp.pop %v260
  %v262 = vmul.f32 1.0, %v261
  %v263 = vtanh.pop %v256
  %v264 = vmul.f32 %v262, %v202
  %266 = vrot.lane.b32.xlu0 %v263, 64
  %v267 = vpop.permute.xlu0 %266
  %v269 = vmul.f32 %v262, %v267
  %271 = vrot.lane.b32.xlu0 %v269, 32
  %v272 = vpop.permute.xlu0 %271
  %v274 = vadd.f32 %v264, %v272
  %v275 = vtanh.pop %v274
  %277 = vrot.lane.b32.xlu0 %v275, 64
  %v278 = vpop.permute.xlu0 %277
  %v280 = vmul.f32 %v262, %v278
  %v281 = vpack.c.bf16 %v280, %v280
  %283 = vrot.lane.b32.xlu0 %v281, 32
  %v284 = vpop.permute.xlu0 %283
  %v286 = vsel %vm136, %v284, 0
  %288 = vmatprep.subr.bf16.mxu0 0
  %289 = vmatpush1.bf16.msra.mxu0 0
  %290 = vmatprep.subr.bf16.mxu0 0
  %291 = vmatpush1.bf16.msra.mxu0 0
  %292 = vmatprep.subr.bf16.mxu0 0
  %293 = vmatpush1.bf16.msra.mxu0 0
  %294 = vmatprep.subr.bf16.mxu0 0
  %295 = vmatpush1.bf16.msra.mxu0 0
  %296 = vmatprep.subr.bf16.mxu0 0
  %297 = vmatpush1.bf16.msra.mxu0 0
  %298 = vmatprep.subr.bf16.mxu0 0
  %299 = vmatpush1.bf16.msra.mxu0 0
  %300 = vmatprep.subr.bf16.mxu0 0
  %301 = vmatpush1.bf16.msra.mxu0 %v34
  %302 = vmatprep.subr.bf16.mxu0 0
  %303 = vmatpush1.bf16.msra.mxu0 %v33
  %304 = vmatprep.subr.bf16.mxu0 0
  %305 = vmatpush2.bf16.msra.mxu0 0
  %306 = vmatprep.subr.bf16.mxu0 0
  %307 = vmatpush2.bf16.msra.mxu0 0
  %308 = vmatprep.subr.bf16.mxu0 0
  %309 = vmatpush2.bf16.msra.mxu0 0
  %310 = vmatprep.subr.bf16.mxu0 0
  %311 = vmatpush2.bf16.msra.mxu0 0
  %312 = vmatprep.subr.bf16.mxu0 0
  %313 = vmatpush2.bf16.msra.mxu0 0
  %314 = vmatprep.subr.bf16.mxu0 0
  %315 = vmatpush2.bf16.msra.mxu0 0
  %316 = vmatprep.subr.bf16.mxu0 0
  %317 = vmatpush2.bf16.msra.mxu0 0
  %318 = vmatprep.subr.bf16.mxu0 0
  %319 = vmatpush2.bf16.msra.mxu0 0
  %320 = vmatprep.mubr.bf16.mxu0 0
  %321 = vmatmul.mubr.bf16.gmra.mxu0 %v286
  %v322 = vpop.f32.mrf.mxu0
  %v323 = vadd.f32 0.0, %v322
  %v324 = vpop.f32.mrf.mxu0
  %v325 = vpop.f32.mrf.mxu0
  %v326 = vpop.f32.mrf.mxu0
  %327 = vdwg.mxu0
  %v328 = vadd.f32 %v110, %v323
  %v329 = vxor.u32 %v328, 2147483648
  %v330 = vmul.f32 %v329, 1.442695
  %v331 = vpow.pop %v330
  %v332 = vadd.f32 %v331, 1.0
  %v333 = vrcp.pop %v332
  %v334 = vmul.f32 1.0, %v333
  %v335 = vtanh.pop %v328
  %v336 = vmul.f32 %v334, %v274
  %338 = vrot.lane.b32.xlu0 %v335, 64
  %v339 = vpop.permute.xlu0 %338
  %v341 = vmul.f32 %v334, %v339
  %343 = vrot.lane.b32.xlu0 %v341, 32
  %v344 = vpop.permute.xlu0 %343
  %v346 = vadd.f32 %v336, %v344
  %v347 = vtanh.pop %v346
  %349 = vrot.lane.b32.xlu0 %v347, 64
  %v350 = vpop.permute.xlu0 %349
  %v352 = vmul.f32 %v334, %v350
  %v353 = vpack.c.bf16 %v352, %v352
  %355 = vrot.lane.b32.xlu0 %v353, 32
  %v356 = vpop.permute.xlu0 %355
  %v358 = vsel %vm136, %v356, 0
  %360 = vmatprep.subr.bf16.mxu0 0
  %361 = vmatpush1.bf16.msra.mxu0 0
  %362 = vmatprep.subr.bf16.mxu0 0
  %363 = vmatpush1.bf16.msra.mxu0 0
  %364 = vmatprep.subr.bf16.mxu0 0
  %365 = vmatpush1.bf16.msra.mxu0 0
  %366 = vmatprep.subr.bf16.mxu0 0
  %367 = vmatpush1.bf16.msra.mxu0 0
  %368 = vmatprep.subr.bf16.mxu0 0
  %369 = vmatpush1.bf16.msra.mxu0 0
  %370 = vmatprep.subr.bf16.mxu0 0
  %371 = vmatpush1.bf16.msra.mxu0 0
  %372 = vmatprep.subr.bf16.mxu0 0
  %373 = vmatpush1.bf16.msra.mxu0 %v34
  %374 = vmatprep.subr.bf16.mxu0 0
  %375 = vmatpush1.bf16.msra.mxu0 %v33
  %376 = vmatprep.subr.bf16.mxu0 0
  %377 = vmatpush2.bf16.msra.mxu0 0
  %378 = vmatprep.subr.bf16.mxu0 0
  %379 = vmatpush2.bf16.msra.mxu0 0
  %380 = vmatprep.subr.bf16.mxu0 0
  %381 = vmatpush2.bf16.msra.mxu0 0
  %382 = vmatprep.subr.bf16.mxu0 0
  %383 = vmatpush2.bf16.msra.mxu0 0
  %384 = vmatprep.subr.bf16.mxu0 0
  %385 = vmatpush2.bf16.msra.mxu0 0
  %386 = vmatprep.subr.bf16.mxu0 0
  %387 = vmatpush2.bf16.msra.mxu0 0
  %388 = vmatprep.subr.bf16.mxu0 0
  %389 = vmatpush2.bf16.msra.mxu0 0
  %390 = vmatprep.subr.bf16.mxu0 0
  %391 = vmatpush2.bf16.msra.mxu0 0
  %392 = vmatprep.mubr.bf16.mxu0 0
  %393 = vmatmul.mubr.bf16.gmra.mxu0 %v358
  %v394 = vpop.f32.mrf.mxu0
  %v395 = vadd.f32 0.0, %v394
  %v396 = vpop.f32.mrf.mxu0
  %v397 = vpop.f32.mrf.mxu0
  %v398 = vpop.f32.mrf.mxu0
  %399 = vdwg.mxu0
  %v400 = vadd.f32 %v113, %v395
  %v401 = vxor.u32 %v400, 2147483648
  %v402 = vmul.f32 %v401, 1.442695
  %v403 = vpow.pop %v402
  %v404 = vadd.f32 %v403, 1.0
  %v405 = vrcp.pop %v404
  %v406 = vmul.f32 1.0, %v405
  %v407 = vtanh.pop %v400
  %v408 = vmul.f32 %v406, %v346
  %410 = vrot.lane.b32.xlu0 %v407, 64
  %v411 = vpop.permute.xlu0 %410
  %v413 = vmul.f32 %v406, %v411
  %415 = vrot.lane.b32.xlu0 %v413, 32
  %v416 = vpop.permute.xlu0 %415
  %v418 = vadd.f32 %v408, %v416
  %v419 = vtanh.pop %v418
  %421 = vrot.lane.b32.xlu0 %v419, 64
  %v422 = vpop.permute.xlu0 %421
  %v424 = vmul.f32 %v406, %v422
  %v425 = vpack.c.bf16 %v424, %v424
  %427 = vrot.lane.b32.xlu0 %v425, 32
  %v428 = vpop.permute.xlu0 %427
  %v430 = vsel %vm136, %v428, 0
  %432 = vmatprep.subr.bf16.mxu0 0
  %433 = vmatpush1.bf16.msra.mxu0 0
  %434 = vmatprep.subr.bf16.mxu0 0
  %435 = vmatpush1.bf16.msra.mxu0 0
  %436 = vmatprep.subr.bf16.mxu0 0
  %437 = vmatpush1.bf16.msra.mxu0 0
  %438 = vmatprep.subr.bf16.mxu0 0
  %439 = vmatpush1.bf16.msra.mxu0 0
  %440 = vmatprep.subr.bf16.mxu0 0
  %441 = vmatpush1.bf16.msra.mxu0 0
  %442 = vmatprep.subr.bf16.mxu0 0
  %443 = vmatpush1.bf16.msra.mxu0 0
  %444 = vmatprep.subr.bf16.mxu0 0
  %445 = vmatpush1.bf16.msra.mxu0 %v34
  %446 = vmatprep.subr.bf16.mxu0 0
  %447 = vmatpush1.bf16.msra.mxu0 %v33
  %448 = vmatprep.subr.bf16.mxu0 0
  %449 = vmatpush2.bf16.msra.mxu0 0
  %450 = vmatprep.subr.bf16.mxu0 0
  %451 = vmatpush2.bf16.msra.mxu0 0
  %452 = vmatprep.subr.bf16.mxu0 0
  %453 = vmatpush2.bf16.msra.mxu0 0
  %454 = vmatprep.subr.bf16.mxu0 0
  %455 = vmatpush2.bf16.msra.mxu0 0
  %456 = vmatprep.subr.bf16.mxu0 0
  %457 = vmatpush2.bf16.msra.mxu0 0
  %458 = vmatprep.subr.bf16.mxu0 0
  %459 = vmatpush2.bf16.msra.mxu0 0
  %460 = vmatprep.subr.bf16.mxu0 0
  %461 = vmatpush2.bf16.msra.mxu0 0
  %462 = vmatprep.subr.bf16.mxu0 0
  %463 = vmatpush2.bf16.msra.mxu0 0
  %464 = vmatprep.mubr.bf16.mxu0 0
  %465 = vmatmul.mubr.bf16.gmra.mxu0 %v430
  %v466 = vpop.f32.mrf.mxu0
  %v467 = vadd.f32 0.0, %v466
  %v468 = vpop.f32.mrf.mxu0
  %v469 = vpop.f32.mrf.mxu0
  %v470 = vpop.f32.mrf.mxu0
  %471 = vdwg.mxu0
  %v472 = vadd.f32 %v118, %v467
  %v473 = vxor.u32 %v472, 2147483648
  %v474 = vmul.f32 %v473, 1.442695
  %v475 = vpow.pop %v474
  %v476 = vadd.f32 %v475, 1.0
  %v477 = vrcp.pop %v476
  %v478 = vmul.f32 1.0, %v477
  %v479 = vtanh.pop %v472
  %v480 = vmul.f32 %v478, %v418
  %482 = vrot.lane.b32.xlu0 %v479, 64
  %v483 = vpop.permute.xlu0 %482
  %v485 = vmul.f32 %v478, %v483
  %487 = vrot.lane.b32.xlu0 %v485, 32
  %v488 = vpop.permute.xlu0 %487
  %v490 = vadd.f32 %v480, %v488
  %v491 = vtanh.pop %v490
  %493 = vrot.lane.b32.xlu0 %v491, 64
  %v494 = vpop.permute.xlu0 %493
  %v496 = vmul.f32 %v478, %v494
  %v497 = vpack.c.bf16 %v496, %v496
  %499 = vrot.lane.b32.xlu0 %v497, 32
  %v500 = vpop.permute.xlu0 %499
  %v502 = vsel %vm136, %v500, 0
  %504 = vmatprep.subr.bf16.mxu0 0
  %505 = vmatpush1.bf16.msra.mxu0 0
  %506 = vmatprep.subr.bf16.mxu0 0
  %507 = vmatpush1.bf16.msra.mxu0 0
  %508 = vmatprep.subr.bf16.mxu0 0
  %509 = vmatpush1.bf16.msra.mxu0 0
  %510 = vmatprep.subr.bf16.mxu0 0
  %511 = vmatpush1.bf16.msra.mxu0 0
  %512 = vmatprep.subr.bf16.mxu0 0
  %513 = vmatpush1.bf16.msra.mxu0 0
  %514 = vmatprep.subr.bf16.mxu0 0
  %515 = vmatpush1.bf16.msra.mxu0 0
  %516 = vmatprep.subr.bf16.mxu0 0
  %517 = vmatpush1.bf16.msra.mxu0 %v34
  %518 = vmatprep.subr.bf16.mxu0 0
  %519 = vmatpush1.bf16.msra.mxu0 %v33
  %520 = vmatprep.subr.bf16.mxu0 0
  %521 = vmatpush2.bf16.msra.mxu0 0
  %522 = vmatprep.subr.bf16.mxu0 0
  %523 = vmatpush2.bf16.msra.mxu0 0
  %524 = vmatprep.subr.bf16.mxu0 0
  %525 = vmatpush2.bf16.msra.mxu0 0
  %526 = vmatprep.subr.bf16.mxu0 0
  %527 = vmatpush2.bf16.msra.mxu0 0
  %528 = vmatprep.subr.bf16.mxu0 0
  %529 = vmatpush2.bf16.msra.mxu0 0
  %530 = vmatprep.subr.bf16.mxu0 0
  %531 = vmatpush2.bf16.msra.mxu0 0
  %532 = vmatprep.subr.bf16.mxu0 0
  %533 = vmatpush2.bf16.msra.mxu0 0
  %534 = vmatprep.subr.bf16.mxu0 0
  %535 = vmatpush2.bf16.msra.mxu0 0
  %536 = vmatprep.mubr.bf16.mxu0 0
  %537 = vmatmul.mubr.bf16.gmra.mxu0 %v502
  %v538 = vpop.f32.mrf.mxu0
  %v539 = vadd.f32 0.0, %v538
  %v540 = vpop.f32.mrf.mxu0
  %v541 = vpop.f32.mrf.mxu0
  %v542 = vpop.f32.mrf.mxu0
  %543 = vdwg.mxu0
  %v544 = vadd.f32 %v121, %v539
  %v545 = vxor.u32 %v544, 2147483648
  %v546 = vmul.f32 %v545, 1.442695
  %v547 = vpow.pop %v546
  %v548 = vadd.f32 %v547, 1.0
  %v549 = vrcp.pop %v548
  %v550 = vmul.f32 1.0, %v549
  %v551 = vtanh.pop %v544
  %v552 = vmul.f32 %v550, %v490
  %554 = vrot.lane.b32.xlu0 %v551, 64
  %v555 = vpop.permute.xlu0 %554
  %v557 = vmul.f32 %v550, %v555
  %559 = vrot.lane.b32.xlu0 %v557, 32
  %v560 = vpop.permute.xlu0 %559
  %v562 = vadd.f32 %v552, %v560
  %v563 = vtanh.pop %v562
  %565 = vrot.lane.b32.xlu0 %v563, 64
  %v566 = vpop.permute.xlu0 %565
  %v568 = vmul.f32 %v550, %v566
  %v569 = vpack.c.bf16 %v568, %v568
  %571 = vrot.lane.b32.xlu0 %v569, 32
  %v572 = vpop.permute.xlu0 %571
  %v574 = vsel %vm136, %v572, 0
  %576 = vmatprep.subr.bf16.mxu0 0
  %577 = vmatpush1.bf16.msra.mxu0 0
  %578 = vmatprep.subr.bf16.mxu0 0
  %579 = vmatpush1.bf16.msra.mxu0 0
  %580 = vmatprep.subr.bf16.mxu0 0
  %581 = vmatpush1.bf16.msra.mxu0 0
  %582 = vmatprep.subr.bf16.mxu0 0
  %583 = vmatpush1.bf16.msra.mxu0 0
  %584 = vmatprep.subr.bf16.mxu0 0
  %585 = vmatpush1.bf16.msra.mxu0 0
  %586 = vmatprep.subr.bf16.mxu0 0
  %587 = vmatpush1.bf16.msra.mxu0 0
  %588 = vmatprep.subr.bf16.mxu0 0
  %589 = vmatpush1.bf16.msra.mxu0 %v34
  %590 = vmatprep.subr.bf16.mxu0 0
  %591 = vmatpush1.bf16.msra.mxu0 %v33
  %592 = vmatprep.subr.bf16.mxu0 0
  %593 = vmatpush2.bf16.msra.mxu0 0
  %594 = vmatprep.subr.bf16.mxu0 0
  %595 = vmatpush2.bf16.msra.mxu0 0
  %596 = vmatprep.subr.bf16.mxu0 0
  %597 = vmatpush2.bf16.msra.mxu0 0
  %598 = vmatprep.subr.bf16.mxu0 0
  %599 = vmatpush2.bf16.msra.mxu0 0
  %600 = vmatprep.subr.bf16.mxu0 0
  %601 = vmatpush2.bf16.msra.mxu0 0
  %602 = vmatprep.subr.bf16.mxu0 0
  %603 = vmatpush2.bf16.msra.mxu0 0
  %604 = vmatprep.subr.bf16.mxu0 0
  %605 = vmatpush2.bf16.msra.mxu0 0
  %606 = vmatprep.subr.bf16.mxu0 0
  %607 = vmatpush2.bf16.msra.mxu0 0
  %608 = vmatprep.mubr.bf16.mxu0 0
  %609 = vmatmul.mubr.bf16.gmra.mxu0 %v574
  %v610 = vpop.f32.mrf.mxu0
  %v611 = vadd.f32 0.0, %v610
  %v612 = vpop.f32.mrf.mxu0
  %v613 = vpop.f32.mrf.mxu0
  %v614 = vpop.f32.mrf.mxu0
  %615 = vdwg.mxu0
  %v616 = vadd.f32 %v126, %v611
  %v617 = vxor.u32 %v616, 2147483648
  %v618 = vmul.f32 %v617, 1.442695
  %v619 = vpow.pop %v618
  %v620 = vadd.f32 %v619, 1.0
  %v621 = vrcp.pop %v620
  %v622 = vmul.f32 1.0, %v621
  %v623 = vtanh.pop %v616
  %v624 = vmul.f32 %v622, %v562
  %626 = vrot.lane.b32.xlu0 %v623, 64
  %v627 = vpop.permute.xlu0 %626
  %v629 = vmul.f32 %v622, %v627
  %631 = vrot.lane.b32.xlu0 %v629, 32
  %v632 = vpop.permute.xlu0 %631
  %v634 = vadd.f32 %v624, %v632
  %v635 = vtanh.pop %v634
  %637 = vrot.lane.b32.xlu0 %v635, 64
  %v638 = vpop.permute.xlu0 %637
  %v640 = vmul.f32 %v622, %v638
  %v641 = vpack.c.bf16 %v640, %v640
  %643 = vrot.lane.b32.xlu0 %v641, 32
  %v644 = vpop.permute.xlu0 %643
  %v646 = vsel %vm136, %v644, 0
  %648 = vmatprep.subr.bf16.mxu0 0
  %649 = vmatpush1.bf16.msra.mxu0 0
  %650 = vmatprep.subr.bf16.mxu0 0
  %651 = vmatpush1.bf16.msra.mxu0 0
  %652 = vmatprep.subr.bf16.mxu0 0
  %653 = vmatpush1.bf16.msra.mxu0 0
  %654 = vmatprep.subr.bf16.mxu0 0
  %655 = vmatpush1.bf16.msra.mxu0 0
  %656 = vmatprep.subr.bf16.mxu0 0
  %657 = vmatpush1.bf16.msra.mxu0 0
  %658 = vmatprep.subr.bf16.mxu0 0
  %659 = vmatpush1.bf16.msra.mxu0 0
  %660 = vmatprep.subr.bf16.mxu0 0
  %661 = vmatpush1.bf16.msra.mxu0 %v34
  %662 = vmatprep.subr.bf16.mxu0 0
  %663 = vmatpush1.bf16.msra.mxu0 %v33
  %664 = vmatprep.subr.bf16.mxu0 0
  %665 = vmatpush2.bf16.msra.mxu0 0
  %666 = vmatprep.subr.bf16.mxu0 0
  %667 = vmatpush2.bf16.msra.mxu0 0
  %668 = vmatprep.subr.bf16.mxu0 0
  %669 = vmatpush2.bf16.msra.mxu0 0
  %670 = vmatprep.subr.bf16.mxu0 0
  %671 = vmatpush2.bf16.msra.mxu0 0
  %672 = vmatprep.subr.bf16.mxu0 0
  %673 = vmatpush2.bf16.msra.mxu0 0
  %674 = vmatprep.subr.bf16.mxu0 0
  %675 = vmatpush2.bf16.msra.mxu0 0
  %676 = vmatprep.subr.bf16.mxu0 0
  %677 = vmatpush2.bf16.msra.mxu0 0
  %678 = vmatprep.subr.bf16.mxu0 0
  %679 = vmatpush2.bf16.msra.mxu0 0
  %680 = vmatprep.mubr.bf16.mxu0 0
  %681 = vmatmul.mubr.bf16.gmra.mxu0 %v646
  %v682 = vpop.f32.mrf.mxu0
  %v683 = vadd.f32 0.0, %v682
  %v684 = vpop.f32.mrf.mxu0
  %v685 = vpop.f32.mrf.mxu0
  %v686 = vpop.f32.mrf.mxu0
  %687 = vdwg.mxu0
  %v688 = vadd.f32 %v129, %v683
  %v689 = vxor.u32 %v688, 2147483648
  %v690 = vmul.f32 %v689, 1.442695
  %v691 = vpow.pop %v690
  %v692 = vadd.f32 %v691, 1.0
  %v693 = vrcp.pop %v692
  %v694 = vmul.f32 1.0, %v693
  %v695 = vtanh.pop %v688
  %v696 = vmul.f32 %v694, %v634
  %698 = vrot.lane.b32.xlu0 %v695, 64
  %v699 = vpop.permute.xlu0 %698
  %v701 = vmul.f32 %v694, %v699
  %703 = vrot.lane.b32.xlu0 %v701, 32
  %v704 = vpop.permute.xlu0 %703
  %v706 = vadd.f32 %v696, %v704
  %v707 = vtanh.pop %v706
  %709 = vrot.lane.b32.xlu0 %v707, 64
  %v710 = vpop.permute.xlu0 %709
  %v712 = vmul.f32 %v694, %v710
  %714 = vrot.lane.b32.xlu0 %v712, 32
  %v715 = vpop.permute.xlu0 %714
  %717 = vst.msk [vmem:[%s7] sm:$0xff] %vm136, %v715
  %719 = vrot.lane.b32.xlu0 %v706, 96
  %v720 = vpop.permute.xlu0 %719
  %s722 = scalar_lea.vmem %s7, 8
  %723 = vst.msk [vmem:[%s722] sm:$0xff] %vm136, %v720
  %v724 = vpack.c.bf16 %v280, %v208
  %v725 = vpack.c.bf16 %v424, %v352
  %v726 = vpack.c.bf16 %v568, %v496
  %v727 = vpack.c.bf16 %v712, %v640
  %v728 = vld [vmem:[%s4] sm:$0xff]
  %v729 = vld [vmem:[%s4 + $0x8] sm:$0xff]
  %v730 = vld [vmem:[%s4 + $0x10] sm:$0xff]
  %v731 = vld [vmem:[%s4 + $0x18] sm:$0xff]
  %v732 = vpack.c.bf16 %v729, %v728
  %v733 = vpack.c.bf16 %v731, %v730
  %v734 = vld [vmem:[%s5] sm:$0x1]
  %v736 = vlaneseq
  %v737 = vshrl.u32 %v736, 7
  %v738 = vsub.s32 0, %v737
  %v739 = vrot.slane %v734, %v738
  %745 = vrot.lane.b32.xlu0 %v724, 32
  %v746 = vpop.permute.xlu0 %745
  %747 = vrot.lane.b32.xlu0 %v725, 32
  %v748 = vpop.permute.xlu0 %747
  %749 = vrot.lane.b32.xlu0 %v726, 32
  %v750 = vpop.permute.xlu0 %749
  %751 = vrot.lane.b32.xlu0 %v727, 32
  %v752 = vpop.permute.xlu0 %751
  %v754 = vsel %vm136, %v746, 0
  %v757 = vsel %vm136, %v748, 0
  %v760 = vsel %vm136, %v750, 0
  %v763 = vsel %vm136, %v752, 0
  %765 = vmatprep.subr.bf16.mxu0 0
  %766 = vmatpush1.bf16.msra.mxu0 0
  %767 = vmatprep.subr.bf16.mxu0 0
  %768 = vmatpush1.bf16.msra.mxu0 0
  %769 = vmatprep.subr.bf16.mxu0 0
  %770 = vmatpush1.bf16.msra.mxu0 0
  %771 = vmatprep.subr.bf16.mxu0 0
  %772 = vmatpush1.bf16.msra.mxu0 0
  %773 = vmatprep.subr.bf16.mxu0 0
  %774 = vmatpush1.bf16.msra.mxu0 0
  %775 = vmatprep.subr.bf16.mxu0 0
  %776 = vmatpush1.bf16.msra.mxu0 0
  %777 = vmatprep.subr.bf16.mxu0 0
  %778 = vmatpush1.bf16.msra.mxu0 %v733
  %779 = vmatprep.subr.bf16.mxu0 0
  %780 = vmatpush1.bf16.msra.mxu0 %v732
  %781 = vmatprep.subr.bf16.mxu0 0
  %782 = vmatpush2.bf16.msra.mxu0 0
  %783 = vmatprep.subr.bf16.mxu0 0
  %784 = vmatpush2.bf16.msra.mxu0 0
  %785 = vmatprep.subr.bf16.mxu0 0
  %786 = vmatpush2.bf16.msra.mxu0 0
  %787 = vmatprep.subr.bf16.mxu0 0
  %788 = vmatpush2.bf16.msra.mxu0 0
  %789 = vmatprep.subr.bf16.mxu0 0
  %790 = vmatpush2.bf16.msra.mxu0 0
  %791 = vmatprep.subr.bf16.mxu0 0
  %792 = vmatpush2.bf16.msra.mxu0 0
  %793 = vmatprep.subr.bf16.mxu0 0
  %794 = vmatpush2.bf16.msra.mxu0 0
  %795 = vmatprep.subr.bf16.mxu0 0
  %796 = vmatpush2.bf16.msra.mxu0 0
  %797 = vmatprep.mubr.bf16.mxu0 0
  %798 = vmatmul.mubr.bf16.gmra.mxu0 %v754
  %v799 = vpop.f32.mrf.mxu0
  %v800 = vadd.f32 %v739, %v799
  %v801 = vpop.f32.mrf.mxu0
  %v802 = vpop.f32.mrf.mxu0
  %v803 = vadd.f32 %v739, %v802
  %v804 = vpop.f32.mrf.mxu0
  %805 = vmatprep.mubr.bf16.mxu0 0
  %806 = vmatmul.mubr.bf16.gmra.mxu0 %v757
  %v807 = vpop.f32.mrf.mxu0
  %v808 = vadd.f32 %v739, %v807
  %v809 = vpop.f32.mrf.mxu0
  %v810 = vpop.f32.mrf.mxu0
  %v811 = vadd.f32 %v739, %v810
  %v812 = vpop.f32.mrf.mxu0
  %813 = vmatprep.mubr.bf16.mxu0 0
  %814 = vmatmul.mubr.bf16.gmra.mxu0 %v760
  %v815 = vpop.f32.mrf.mxu0
  %v816 = vadd.f32 %v739, %v815
  %v817 = vpop.f32.mrf.mxu0
  %v818 = vpop.f32.mrf.mxu0
  %v819 = vadd.f32 %v739, %v818
  %v820 = vpop.f32.mrf.mxu0
  %821 = vmatprep.mubr.bf16.mxu0 0
  %822 = vmatmul.mubr.bf16.gmra.mxu0 %v763
  %v823 = vpop.f32.mrf.mxu0
  %v824 = vadd.f32 %v739, %v823
  %v825 = vpop.f32.mrf.mxu0
  %v826 = vpop.f32.mrf.mxu0
  %v827 = vadd.f32 %v739, %v826
  %v828 = vpop.f32.mrf.mxu0
  %829 = vdwg.mxu0
  %830 = vst [vmem:[%s6] sm:$0xff] %v800
  %831 = vst [vmem:[%s6 + $0x8] sm:$0xff] %v803
  %832 = vst [vmem:[%s6 + $0x10] sm:$0xff] %v808
  %833 = vst [vmem:[%s6 + $0x18] sm:$0xff] %v811
  %834 = vst [vmem:[%s6 + $0x20] sm:$0xff] %v816
  %835 = vst [vmem:[%s6 + $0x28] sm:$0xff] %v819
  %836 = vst [vmem:[%s6 + $0x30] sm:$0xff] %v824
  %837 = vst [vmem:[%s6 + $0x38] sm:$0xff] %v827
  // Predicated region
  $region26: #{decoder_net_forward.1} parent=0 // pred_check
    _
  $region27: #{decoder_net_forward.1} parent=0 // pred_check_branch
    %839 = sbr.rel (0) target = $region29
  $region28: #{decoder_net_forward.1} parent=0 // pred_region
    _
  $region29: #{decoder_net_forward.1} parent=0 // pred_fallthru
    _
  // Predicated region
  $region30: #{decoder_net_forward.1} parent=0 // pred_check
    _
  $region31: #{decoder_net_forward.1} parent=0 // pred_check_branch
    %841 = sbr.rel (0) target = $region33
  $region32: #{decoder_net_forward.1} parent=0 // pred_region
    _
  $region33: #{decoder_net_forward.1} parent=0 // pred_fallthru
    _
  // Predicated region
  $region34: #{decoder_net_forward.1} parent=0 // pred_check
    _
  $region35: #{decoder_net_forward.1} parent=0 // pred_check_branch
    %843 = sbr.rel (0) target = $region37
  $region36: #{decoder_net_forward.1} parent=0 // pred_region
    _
  $region37: #{decoder_net_forward.1} parent=0 // pred_fallthru
    _
  // Predicated region
  $region38: #{decoder_net_forward.1} parent=0 // pred_check
    _
  $region39: #{decoder_net_forward.1} parent=0 // pred_check_branch
    %845 = sbr.rel (0) target = $region41
  $region40: #{decoder_net_forward.1} parent=0 // pred_region
    _
  $region41: #{decoder_net_forward.1} parent=0 // pred_fallthru
    _

</llo_original>
